<compile_context>
chip_gen: v5e
topology: v5e:2x2
jax: 0.10.0
libtpu: 0.0.40
codegen_flags: <defaults>
</compile_context>

<pallas_src>
import jax
import jax.numpy as jnp
from jax.experimental import pallas as pl
from jax.experimental.pallas import tpu as pltpu  # noqa: F401  (kept for TPU backend parity)


def _occlusion_kernel(xr_ref, xc_ref, o_ref):
    # xr_ref: (H, 1)  = x[:H]              as a column (sublane axis)
    # xc_ref: (1, W)  = x[half : half+W]   as a row    (lane axis)
    # o_ref : (C, H, W)
    block = xr_ref[...] + xc_ref[...] - 1.0             # (H, W) broadcast add on the VPU
    o_ref[...] = jnp.broadcast_to(block, o_ref.shape)   # replicate across channels


def occlusion_fifth_layer(x, size_in, image_shape):
    """Forward pass of OcclusionFifthLayer: y = W @ x + b with the module's
    structured W (two one-hots per row) and b = -1, computed in a Pallas kernel.

    x:           (size_in,) vector
    image_shape: (C, H, W)
    returns:     (size_out,) = (C*H*W,)
    """
    C, H, W = image_shape
    half = size_in // 2
    size_out = C * H * W

    x = x.astype(jnp.float32)
    # Layout plumbing only (a few floats each); the actual compute is in-kernel.
    xr = x[:H].reshape(H, 1)
    xc = x[half:half + W].reshape(1, W)

    y3 = pl.pallas_call(
        _occlusion_kernel,
        out_shape=jax.ShapeDtypeStruct((C, H, W), jnp.float32),
        grid=(1,),
        in_specs=[
            pl.BlockSpec((H, 1), lambda i: (0, 0)),       # full-extent blocks -> legal
            pl.BlockSpec((1, W), lambda i: (0, 0)),
        ],
        out_specs=pl.BlockSpec((C, H, W), lambda i: (0, 0, 0)),
    )(xr, xc)

    # Row-major flatten of (C, H, W) == the module's c*H*W + h*W + w ordering.
    return y3.reshape(size_out)


def init_weights_bias(size_in, size_out, image_shape):
    """Explicit parameter construction mirroring the PyTorch __init__.
    Used only to build the reference W @ x + b for the correctness check."""
    C, H, W = image_shape
    assert size_out == C * H * W
    idx = jnp.arange(size_out)
    i = idx % (H * W)
    r = i // W                      # row-indicator index
    c = i % W                       # col-indicator index (offset by size_in//2)
    weights = (
        jax.nn.one_hot(r, size_in, dtype=jnp.float32)
        + jax.nn.one_hot(size_in // 2 + c, size_in, dtype=jnp.float32)
    )                               # (size_out, size_in), 0/1 entries
    bias = -jnp.ones((size_out,), dtype=jnp.float32)
    return weights, bias


if __name__ == "__main__":
    # Small shapes consistent with the module: image (C=3, H=4, W=4),
    # size_in = 2*4 = 8 (row-indicator half + col-indicator half),
    # size_out = C*H*W = 48.
    C, H, W = 3, 4, 4
    size_in = 2 * H
    size_out = C * H * W

    key = jax.random.PRNGKey(0)
    x = jax.random.normal(key, (size_in,), dtype=jnp.float32)

    y = occlusion_fifth_layer(x, size_in, (C, H, W))
    y = jax.block_until_ready(y)

    # Pure-JAX reference: same math as torch.matmul(self.weights, x) + self.bias.
    weights, bias = init_weights_bias(size_in, size_out, (C, H, W))
    y_ref = weights @ x + bias

    assert y.shape == (size_out,)
    assert jnp.allclose(y, y_ref, atol=1e-5, rtol=1e-5), "mismatch vs reference"

    print("KERNEL_OK")
</pallas_src>

<mosaic_0001>
module attributes {stable_mosaic.version = 11 : i64} {
  func.func @_occlusion_kernel(%arg0: i32, %arg1: memref<4x1xf32, #tpu.memory_space<vmem>>, %arg2: memref<1x4xf32, #tpu.memory_space<vmem>>, %arg3: memref<3x4x4xf32, #tpu.memory_space<vmem>>) attributes {dimension_semantics = [#tpu.dimension_semantics<arbitrary>], iteration_bounds = array<i64: 1>, scalar_prefetch = 0 : i64, scratch_operands = 0 : i64, tpu.core_type = #tpu.core_type<tc>, window_params = [{pipeline_mode = #tpu.pipeline_mode<synchronous>, transform_indices = @transform_0, window_bounds = array<i64: 4, 1>}, {pipeline_mode = #tpu.pipeline_mode<synchronous>, transform_indices = @transform_1, window_bounds = array<i64: 1, 4>}, {pipeline_mode = #tpu.pipeline_mode<synchronous>, transform_indices = @transform_2, window_bounds = array<i64: 3, 4, 4>}]} {
    %c0 = arith.constant 0 : index
    %c0_0 = arith.constant 0 : index
    %0 = vector.load %arg1[%c0, %c0_0] : memref<4x1xf32, #tpu.memory_space<vmem>>, vector<4x1xf32>
    %c0_1 = arith.constant 0 : index
    %c0_2 = arith.constant 0 : index
    %1 = vector.load %arg2[%c0_1, %c0_2] : memref<1x4xf32, #tpu.memory_space<vmem>>, vector<1x4xf32>
    %2 = vector.broadcast %0 : vector<4x1xf32> to vector<4x4xf32>
    %3 = vector.broadcast %1 : vector<1x4xf32> to vector<4x4xf32>
    %4 = arith.addf %2, %3 : vector<4x4xf32>
    %cst = arith.constant 1.000000e+00 : f32
    %5 = vector.broadcast %cst : f32 to vector<4x4xf32>
    %6 = arith.subf %4, %5 : vector<4x4xf32>
    %7 = vector.shape_cast %6 : vector<4x4xf32> to vector<1x4x4xf32>
    %8 = vector.broadcast %7 : vector<1x4x4xf32> to vector<3x4x4xf32>
    %c0_3 = arith.constant 0 : index
    %c0_4 = arith.constant 0 : index
    %c0_5 = arith.constant 0 : index
    %9 = vector.load %arg3[%c0_3, %c0_4, %c0_5] : memref<3x4x4xf32, #tpu.memory_space<vmem>>, vector<3x4x4xf32>
    tpu.vector_store %arg3[%c0_3, %c0_4, %c0_5], %8 {strides = array<i32>} : memref<3x4x4xf32, #tpu.memory_space<vmem>>, vector<3x4x4xf32>,
    return
  }
  func.func @transform_0(%arg0: i32) -> (i32, i32) {
    %c0_i32 = arith.constant 0 : i32
    %c0_i32_0 = arith.constant 0 : i32
    %c0_i32_1 = arith.constant 0 : i32
    return %c0_i32, %c0_i32_0 : i32, i32
  }
  func.func @transform_1(%arg0: i32) -> (i32, i32) {
    %c0_i32 = arith.constant 0 : i32
    %c0_i32_0 = arith.constant 0 : i32
    %c0_i32_1 = arith.constant 0 : i32
    return %c0_i32, %c0_i32_0 : i32, i32
  }
  func.func @transform_2(%arg0: i32) -> (i32, i32, i32) {
    %c0_i32 = arith.constant 0 : i32
    %c0_i32_0 = arith.constant 0 : i32
    %c0_i32_1 = arith.constant 0 : i32
    %c0_i32_2 = arith.constant 0 : i32
    return %c0_i32, %c0_i32_0, %c0_i32_1 : i32, i32, i32
  }
}

</mosaic_0001>

<llo_original>
// kernel: tpu_custom_call.1
$region0: #{tpu_custom_call.1}
  #allocation0 [shape = 'u32[]', space=smem, size = 0x4, offset = 0x4, fixed_abs, tag = 'smem constant byte address 0x4 - core index']
  #allocation1 [shape = 'u32[72,128]{1,0:T(1,128)}', space=vmem, size = 0x9000, scoped, tag = 'internal scratch']
  %s0 = inlined_call_operand.vmem [shape: f32[4,1], index: 0, kind: input, shape index: {}]
  %s1 = inlined_call_operand.vmem [shape: f32[1,4], index: 1, kind: input, shape index: {}]
  %s2 = inlined_call_operand.hbm [shape: f32[3,4,4], index: 2, kind: output, shape index: {}]
  %s3 = sld [smem:[#allocation0]]
  $region18: #{tpu_custom_call.1} parent=0
    _
  %s5 = ssub.s32 1, %s3
  %s6 = scalar_select 0, %s5, %s3
  $region1: #{tpu_custom_call.1} parent=0
    #allocation2 [shape = 'u8[6144]{0}', space=vmem, size = 0x1800, scoped, tag = 'output window, operand 0, single buffered']
    #allocation3 [shape = 's32[1]{0}', space=sflag, size = 0x4, scoped, tag = 'scoped memory for tpu_custom_call.1']
    %7 = vsyncpa [#allocation3], 0
    // Predicated region
    $region2: #{tpu_custom_call.1} parent=1 // pred_check
      _
    $region3: #{tpu_custom_call.1} parent=1 // pred_check_branch
      %9 = sbr.rel (0) target = $region5
    $region4: #{tpu_custom_call.1} parent=1 // pred_region
      _
    $region5: #{tpu_custom_call.1} parent=1 // pred_fallthru
      _
    // Predicated region
    $region6: #{tpu_custom_call.1} parent=1 // pred_check
      _
    $region7: #{tpu_custom_call.1} parent=1 // pred_check_branch
      %11 = sbr.rel (0) target = $region9
    $region8: #{tpu_custom_call.1} parent=1 // pred_region
      _
    $region9: #{tpu_custom_call.1} parent=1 // pred_fallthru
      _
    %v12 = vld [vmem:[%s0] sm:$0xf]
    %v13 = vld [vmem:[%s1] sm:$0x1]
    %15 = vset.pattern.permute.xlu0 0
    %16 = vperm.xlu0 %15, %v12
    %v17 = vpop.permute.xlu0 %16
    %v20 = vperm.slane %v13, 0
    %v22 = vadd.f32 %v17, %v20
    %v23 = vsub.f32 %v22, 1.0
    %vm24 = vcmask 27648
    %25 = vst.msk [vmem:[#allocation2] sm:$0xf] %vm24, %v23
    %26 = vst.msk [vmem:[#allocation2 + $0x4] sm:$0xf] %vm24, %v23
    %27 = vst.msk [vmem:[#allocation2 + $0x8] sm:$0xf] %vm24, %v23
    // Predicated region
    $region10: #{tpu_custom_call.1} parent=1 // pred_check
      _
    $region11: #{tpu_custom_call.1} parent=1 // pred_check_branch
      %29 = sbr.rel (0) target = $region13
    $region12: #{tpu_custom_call.1} parent=1 // pred_region
      %31 = vsyncadd [#allocation3], 0
      %s32 = sshll.u32 [#allocation2], 4
      %s33 = int_to_ptr.vmem [resolvable:$true] %s32
      %s34 = sshll.u32 %s2, 4
      %s35 = int_to_ptr.hbm [resolvable:$true] %s34
      %40 = dma.vmem_to_hbm [thread:$0]  %s33, 192, %s35, [#allocation3], 64, 64, 4
    $region13: #{tpu_custom_call.1} parent=1 // pred_fallthru
      _
    // Predicated region
    $region14: #{tpu_custom_call.1} parent=1 // pred_check
      _
    $region15: #{tpu_custom_call.1} parent=1 // pred_check_branch
      %42 = sbr.rel (0) target = $region17
    $region16: #{tpu_custom_call.1} parent=1 // pred_region
      %44 = dma.done [#allocation3], 192
    $region17: #{tpu_custom_call.1} parent=1 // pred_fallthru
      _
    %45 = vsyncpa [#allocation3], 1

</llo_original>
